<compile_context>
chip_gen: v7x
topology: tpu7x:2x2x1
jax: 0.10.0
libtpu: 0.0.40
codegen_flags: <defaults>
</compile_context>

<pallas_src>
import functools
import re

import jax
import jax.numpy as jnp
from jax import lax
from jax.experimental import pallas as pl
from jax.experimental.pallas import tpu as pltpu


def _l2_normalize(x):
    """F.normalize(x, dim=-1): x / max(||x||_2, 1e-12), via rsqrt."""
    x = x.astype(jnp.float32)
    ss = jnp.sum(x * x, axis=-1, keepdims=True)
    eps = 1e-12
    return x * jnp.where(ss > eps * eps, lax.rsqrt(ss), 1.0 / eps)


def _tpu_settings():
    """Returns (generation, vmem_limit_bytes, row_tile_cap, min_grid_steps)."""
    kind = ""
    try:
        kind = jax.devices()[0].device_kind.lower()
    except Exception:
        pass
    m = re.search(r"(\d+)", kind)
    gen = int(m.group(1)) if m else 0
    if gen >= 7:        # v7x: 64 MiB VMEM, 2 TensorCores -> want >= 2 grid steps
        return gen, 48 * 1024 * 1024, 256, 2
    if gen in (5, 6):   # v5e/v5p/v6e: 128 MiB VMEM, single TensorCore
        return gen, 100 * 1024 * 1024, 512, 1
    return gen, 48 * 1024 * 1024, 256, 1


def _pick_row_tile(n_rows, cap, granule, min_steps):
    """Largest multiple of `granule` <= cap giving (best effort) >= min_steps tiles."""
    target = max(granule, n_rows // max(min_steps, 1))
    t = min(cap, target)
    return max(granule, (t // granule) * granule)


def _nt_xent_kernel(z_ref, out_ref, *, inv_t, block_rows, n_pad_rows, exp_dtype):
    # z_ref: (Np, Dp) L2-normalized, zero-padded embeddings (MXU dtype); the same
    # block every grid step, so it stays VMEM-resident.  Each step handles
    # `block_rows` query rows taken as a slice of the resident keys (no extra DMA).
    i = pl.program_id(0)
    r0 = pl.multiple_of(i * block_rows, block_rows)

    q_m = z_ref[pl.ds(r0, block_rows), :]              # (t, Dp) query tile (cast dtype)
    q_f = q_m.astype(jnp.float32)
    q_s = (q_f * inv_t).astype(q_m.dtype)              # fold 1/T into the MXU operand

    # One wide (t, Np) matmul against the resident keys; contract last vs last
    # dim so no transpose / XLU copy is needed.  f32 accumulation on the MXU.
    dn = (((1,), (1,)), ((), ()))
    s = lax.dot_general(q_s, z_ref[...], dn, preferred_element_type=jnp.float32)

    # exp in exp_dtype (bf16 -> packed EUP path on v6e/v7x); row sums in f32.
    e = jnp.exp(s.astype(exp_dtype)).astype(jnp.float32)
    row_sum = jnp.sum(e, axis=-1, keepdims=True)       # (t, 1)

    # Remove the self-similarity term algebraically (no NxN iota / bool mask):
    # diag(s)[r] = dot(q_s[r], key_row[r]) with key_row[r] == q_m[r].  Computing
    # it from the SAME cast operands keeps the cancellation exact under bf16.
    diag = jnp.sum(q_s.astype(jnp.float32) * q_f, axis=-1, keepdims=True)
    # Each zero-padded key row contributes exactly exp(0) = 1 to every row sum.
    row_sum = row_sum - jnp.exp(diag) - float(n_pad_rows)

    out_ref[...] = jnp.log(row_sum)


def nt_xent(z_i, z_j, temperature=10.0, *, mxu_dtype=None, exp_dtype=None,
            max_row_tile=None, single_buffer_keys=True):
    B, D = z_i.shape
    assert z_j.shape == (B, D)
    N = 2 * B

    gen, vmem_limit, tile_cap, min_steps = _tpu_settings()
    if mxu_dtype is None:
        # bf16-native MXUs on v5e/v6e/v7x; accumulation stays f32.
        mxu_dtype = jnp.bfloat16
    if exp_dtype is None:
        # Packed bf16 EUP only exists on v6e/v7x; keep f32 exp elsewhere.
        exp_dtype = jnp.bfloat16 if (gen >= 6 and mxu_dtype == jnp.bfloat16) else jnp.float32

    granule = 16 if mxu_dtype == jnp.bfloat16 else 8   # bf16 packs 2 rows / sublane
    cap = max_row_tile if max_row_tile is not None else tile_cap
    t = _pick_row_tile(N, cap, granule, min_steps)
    Np = pl.cdiv(N, t) * t                             # pad query/key rows to tile
    n_pad = Np - N
    Dp = pl.cdiv(D, 128) * 128                         # pad lanes; exact for dots

    # One fused XLA pass: L2-normalize, positive-pair logits (f32, matches the
    # reference), concat the two views, zero-pad rows/lanes, cast for the MXU.
    zi_n = _l2_normalize(z_i)
    zj_n = _l2_normalize(z_j)
    pos = jnp.sum(zi_n * zj_n, axis=-1) * (1.0 / float(temperature))   # (B,)
    z = jnp.concatenate([zi_n, zj_n], axis=0)                          # (N, D)
    z = jnp.pad(z, ((0, n_pad), (0, Dp - D))).astype(mxu_dtype)        # (Np, Dp)

    kernel = functools.partial(
        _nt_xent_kernel,
        inv_t=1.0 / float(temperature),
        block_rows=t,
        n_pad_rows=n_pad,
        exp_dtype=exp_dtype,
    )

    num_tiles = Np // t
    cost = pl.CostEstimate(
        flops=int(2 * Np * Np * Dp),
        transcendentals=int(Np * Np + 2 * Np),
        bytes_accessed=int(Np * Dp * jnp.dtype(mxu_dtype).itemsize + Np * 4),
    )

    def build(single_buf):
        spec_kwargs = {"pipeline_mode": pl.Buffered(1)} if single_buf else {}
        return pl.pallas_call(
            kernel,
            out_shape=jax.ShapeDtypeStruct((Np, 1), jnp.float32),
            grid=(num_tiles,),
            in_specs=[
                # Keys: same block every step -> VMEM-resident, no re-DMA.
                pl.BlockSpec((Np, Dp), lambda i: (0, 0), **spec_kwargs),
            ],
            out_specs=pl.BlockSpec((t, 1), lambda i: (i, 0)),
            compiler_params=pltpu.CompilerParams(
                dimension_semantics=("parallel",),     # row tiles are independent
                vmem_limit_bytes=vmem_limit,
            ),
            cost_estimate=cost,
        )

    try:
        log_row_sum = build(single_buffer_keys)(z)
    except Exception:
        # TODO(synk): Buffered(1) single-buffering of the constant-index key block
        # is a VMEM-only optimization; fall back to default buffering if rejected.
        log_row_sum = build(False)(z)

    # TODO(synk): for very large B, chunk the key axis inside the kernel to bound
    # the (t, 2B) f32 live range instead of relying on the tile cap alone.

    log_row_sum = log_row_sum[:N, 0]                   # drop padded query rows
    pos2 = jnp.concatenate([pos, pos], axis=0)         # (N,)
    # Trivial final mean over 2B scalars stays in XLA so the grid axis is "parallel".
    return jnp.mean(log_row_sum - pos2)


def nt_xent_ref(z_i, z_j, temperature=10.0):
    """Pure-JAX reference mirroring the PyTorch forward."""
    eps = 1e-12
    zi = z_i / jnp.maximum(jnp.linalg.norm(z_i, axis=-1, keepdims=True), eps)
    zj = z_j / jnp.maximum(jnp.linalg.norm(z_j, axis=-1, keepdims=True), eps)
    B = zi.shape[0]
    N = 2 * B
    out = jnp.concatenate([zi, zj], axis=0)
    esim = jnp.exp(out @ out.T / temperature)
    mask = ~jnp.eye(N, dtype=bool)
    row_sum = jnp.sum(jnp.where(mask, esim, 0.0), axis=-1)
    pos = jnp.exp(jnp.sum(zi * zj, axis=-1) / temperature)
    pos = jnp.concatenate([pos, pos], axis=0)
    return jnp.mean(-jnp.log(pos / row_sum))


if __name__ == "__main__":
    key = jax.random.PRNGKey(0)
    k1, k2 = jax.random.split(key)
    B, D = 8, 32  # batch of 8 embeddings, hidden dim 32 -> N = 16
    z_i = jax.random.normal(k1, (B, D), dtype=jnp.float32)
    z_j = jax.random.normal(k2, (B, D), dtype=jnp.float32)

    loss_ref = jax.block_until_ready(nt_xent_ref(z_i, z_j, temperature=10.0))

    # Exact-parity config (f32 MXU operands + f32 exp): tight check vs. reference.
    loss_f32 = jax.block_until_ready(
        nt_xent(z_i, z_j, temperature=10.0,
                mxu_dtype=jnp.float32, exp_dtype=jnp.float32))
    assert jnp.allclose(loss_f32, loss_ref, rtol=1e-4, atol=1e-4), (loss_f32, loss_ref)

    # Default fast config (bf16 MXU operands; bf16 exp on v6e/v7x): relaxed tol.
    loss_fast = jax.block_until_ready(nt_xent(z_i, z_j, temperature=10.0))
    assert jnp.allclose(loss_fast, loss_ref, rtol=2e-2, atol=2e-2), (loss_fast, loss_ref)

    print("KERNEL_OK")
</pallas_src>

<mosaic_0001>
module attributes {stable_mosaic.version = 11 : i64} {
  func.func @_nt_xent_kernel(%arg0: i32, %arg1: memref<16x128xf32, #tpu.memory_space<vmem>>, %arg2: memref<16x1xf32, #tpu.memory_space<vmem>>) attributes {dimension_semantics = [#tpu.dimension_semantics<parallel>], iteration_bounds = array<i64: 1>, scalar_prefetch = 0 : i64, scratch_operands = 0 : i64, tpu.core_type = #tpu.core_type<tc>, window_params = [{pipeline_mode = #tpu.pipeline_mode<synchronous>, transform_indices = @transform_0, window_bounds = array<i64: 16, 128>}, {transform_indices = @transform_1, window_bounds = array<i64: 16, 1>}]} {
    %c16_i32 = arith.constant 16 : i32
    %0 = arith.muli %arg0, %c16_i32 : i32
    %1 = tpu.assume_multiple %0, 16 : i32
    %2 = arith.index_cast %1 : i32 to index
    %c0 = arith.constant 0 : index
    %3 = vector.load %arg1[%2, %c0] : memref<16x128xf32, #tpu.memory_space<vmem>>, vector<16x128xf32>
    %cst = arith.constant 1.000000e-01 : f32
    %4 = vector.broadcast %cst : f32 to vector<16x128xf32>
    %5 = arith.mulf %3, %4 : vector<16x128xf32>
    %c0_0 = arith.constant 0 : index
    %c0_1 = arith.constant 0 : index
    %6 = vector.load %arg1[%c0_0, %c0_1] : memref<16x128xf32, #tpu.memory_space<vmem>>, vector<16x128xf32>
    %cst_2 = arith.constant dense<0.000000e+00> : vector<16x16xf32>
    %7 = tpu.matmul %5, %6, %cst_2 {dimension_numbers = #tpu.dot_dimension_numbers<[1], [1], [0], [0], [0, 0, 1, 0], [], []>} : vector<16x128xf32>, vector<16x128xf32>, vector<16x16xf32> -> vector<16x16xf32>
    %8 = math.exp %7 : vector<16x16xf32>
    %cst_3 = arith.constant dense<0.000000e+00> : vector<16xf32>
    %9 = vector.multi_reduction <add>, %8, %cst_3 [1] : vector<16x16xf32> to vector<16xf32>
    %10 = vector.shape_cast %9 : vector<16xf32> to vector<16x1xf32>
    %11 = arith.mulf %5, %3 : vector<16x128xf32>
    %cst_4 = arith.constant dense<0.000000e+00> : vector<16xf32>
    %12 = vector.multi_reduction <add>, %11, %cst_4 [1] : vector<16x128xf32> to vector<16xf32>
    %13 = vector.shape_cast %12 : vector<16xf32> to vector<16x1xf32>
    %14 = math.exp %13 : vector<16x1xf32>
    %15 = arith.subf %10, %14 : vector<16x1xf32>
    %cst_5 = arith.constant 0.000000e+00 : f32
    %16 = vector.broadcast %cst_5 : f32 to vector<16x1xf32>
    %17 = arith.subf %15, %16 : vector<16x1xf32>
    %18 = math.log %17 : vector<16x1xf32>
    %c0_6 = arith.constant 0 : index
    %c0_7 = arith.constant 0 : index
    %19 = vector.load %arg2[%c0_6, %c0_7] : memref<16x1xf32, #tpu.memory_space<vmem>>, vector<16x1xf32>
    tpu.vector_store %arg2[%c0_6, %c0_7], %18 {strides = array<i32>} : memref<16x1xf32, #tpu.memory_space<vmem>>, vector<16x1xf32>,
    return
  }
  func.func @transform_0(%arg0: i32) -> (i32, i32) {
    %c0_i32 = arith.constant 0 : i32
    %c0_i32_0 = arith.constant 0 : i32
    %c0_i32_1 = arith.constant 0 : i32
    return %c0_i32, %c0_i32_0 : i32, i32
  }
  func.func @transform_1(%arg0: i32) -> (i32, i32) {
    %c0_i32 = arith.constant 0 : i32
    %c0_i32_0 = arith.constant 0 : i32
    return %arg0, %c0_i32 : i32, i32
  }
}

module attributes {stable_mosaic.version = 11 : i64} {
  func.func @_nt_xent_kernel(%arg0: i32, %arg1: memref<16x128xf32, #tpu.memory_space<vmem>>, %arg2: memref<16x1xf32, #tpu.memory_space<vmem>>) attributes {dimension_semantics = [#tpu.dimension_semantics<parallel>], iteration_bounds = array<i64: 1>, scalar_prefetch = 0 : i64, scratch_operands = 0 : i64, tpu.core_type = #tpu.core_type<tc>, window_params = [{pipeline_mode = #tpu.pipeline_mode<synchronous>, transform_indices = @transform_0, window_bounds = array<i64: 16, 128>}, {transform_indices = @transform_1, window_bounds = array<i64: 16, 1>}]} {
    %c16_i32 = arith.constant 16 : i32
    %0 = arith.muli %arg0, %c16_i32 : i32
    %1 = tpu.assume_multiple %0, 16 : i32
    %2 = arith.index_cast %1 : i32 to index
    %c0 = arith.constant 0 : index
    %3 = vector.load %arg1[%2, %c0] : memref<16x128xf32, #tpu.memory_space<vmem>>, vector<16x128xf32>
    %cst = arith.constant 1.000000e-01 : f32
    %4 = vector.broadcast %cst : f32 to vector<16x128xf32>
    %5 = arith.mulf %3, %4 : vector<16x128xf32>
    %c0_0 = arith.constant 0 : index
    %c0_1 = arith.constant 0 : index
    %6 = vector.load %arg1[%c0_0, %c0_1] : memref<16x128xf32, #tpu.memory_space<vmem>>, vector<16x128xf32>
    %cst_2 = arith.constant dense<0.000000e+00> : vector<16x16xf32>
    %7 = tpu.matmul %5, %6, %cst_2 {dimension_numbers = #tpu.dot_dimension_numbers<[1], [1], [0], [0], [0, 0, 1, 0], [], []>} : vector<16x128xf32>, vector<16x128xf32>, vector<16x16xf32> -> vector<16x16xf32>
    %8 = math.exp %7 : vector<16x16xf32>
    %cst_3 = arith.constant dense<0.000000e+00> : vector<16xf32>
    %9 = vector.multi_reduction <add>, %8, %cst_3 [1] : vector<16x16xf32> to vector<16xf32>
    %10 = vector.shape_cast %9 : vector<16xf32> to vector<16x1xf32>
    %11 = arith.mulf %5, %3 : vector<16x128xf32>
    %cst_4 = arith.constant dense<0.000000e+00> : vector<16xf32>
    %12 = vector.multi_reduction <add>, %11, %cst_4 [1] : vector<16x128xf32> to vector<16xf32>
    %13 = vector.shape_cast %12 : vector<16xf32> to vector<16x1xf32>
    %14 = math.exp %13 : vector<16x1xf32>
    %15 = arith.subf %10, %14 : vector<16x1xf32>
    %cst_5 = arith.constant 0.000000e+00 : f32
    %16 = vector.broadcast %cst_5 : f32 to vector<16x1xf32>
    %17 = arith.subf %15, %16 : vector<16x1xf32>
    %18 = math.log %17 : vector<16x1xf32>
    %c0_6 = arith.constant 0 : index
    %c0_7 = arith.constant 0 : index
    %19 = vector.load %arg2[%c0_6, %c0_7] : memref<16x1xf32, #tpu.memory_space<vmem>>, vector<16x1xf32>
    tpu.vector_store %arg2[%c0_6, %c0_7], %18 {strides = array<i32>} : memref<16x1xf32, #tpu.memory_space<vmem>>, vector<16x1xf32>,
    return
  }
  func.func @transform_0(%arg0: i32) -> (i32, i32) {
    %c0_i32 = arith.constant 0 : i32
    %c0_i32_0 = arith.constant 0 : i32
    %c0_i32_1 = arith.constant 0 : i32
    return %c0_i32, %c0_i32_0 : i32, i32
  }
  func.func @transform_1(%arg0: i32) -> (i32, i32) {
    %c0_i32 = arith.constant 0 : i32
    %c0_i32_0 = arith.constant 0 : i32
    return %arg0, %c0_i32 : i32, i32
  }
}

</mosaic_0001>

<llo_original>
// kernel: tpu_custom_call.1
$region0: #{tpu_custom_call.1}
  #allocation0 [shape = 'u32[]', space=smem, size = 0x4, offset = 0x4, fixed_abs, tag = 'smem constant byte address 0x4 - core index']
  #allocation1 [shape = 'u32[144,128]{1,0:T(1,128)}', space=vmem, size = 0x12000, scoped, tag = 'internal scratch']
  %s0 = inlined_call_operand.hbm [shape: f32[16,128], index: 0, kind: input, shape index: {}]
  %s1 = inlined_call_operand.vmem [shape: f32[16,1], index: 1, kind: output, shape index: {}]
  %s2 = sld [smem:[#allocation0]]
  $region18: #{tpu_custom_call.1} parent=0
    _
  %s4 = ssub.s32 1, %s2
  %s5 = scalar_select 0, %s4, %s2
  $region1: #{tpu_custom_call.1} parent=0
    #allocation2 [shape = 'u8[8192]{0}', space=vmem, size = 0x2000, scoped, tag = 'input window, operand 0, single buffered']
    #allocation3 [shape = 's32[1]{0}', space=sflag, size = 0x4, scoped, tag = 'scoped memory for tpu_custom_call.1']
    %6 = vsyncpa [#allocation3], 0
    // Predicated region
    $region2: #{tpu_custom_call.1} parent=1 // pred_check
      _
    $region3: #{tpu_custom_call.1} parent=1 // pred_check_branch
      %8 = sbr.rel (0) target = $region5
    $region4: #{tpu_custom_call.1} parent=1 // pred_region
      %s10 = ssub.s32 256, 256
      %11 = vsyncadd [#allocation3], %s10
      %s12 = sshll.u32 [#allocation2], 4
      %s13 = int_to_ptr.vmem [resolvable:$true] %s12
      %18 = dma.hbm_to_vmem [thread:$0]  %s0, 256, %s13, [#allocation3], 128, 128, 8
    $region5: #{tpu_custom_call.1} parent=1 // pred_fallthru
      _
    // Predicated region
    $region6: #{tpu_custom_call.1} parent=1 // pred_check
      _
    $region7: #{tpu_custom_call.1} parent=1 // pred_check_branch
      %20 = sbr.rel (0) target = $region9
    $region8: #{tpu_custom_call.1} parent=1 // pred_region
      %21 = dma.done [#allocation3], 256
    $region9: #{tpu_custom_call.1} parent=1 // pred_fallthru
      _
    %s22 = smul.u32 0, 16
    %s23 = scalar_lea.vmem [#allocation2], %s22
    %v24 = vld [vmem:[%s23] sm:$0xff]
    %v25 = vld [vmem:[%s23 + $0x8] sm:$0xff]
    %v26 = vmul.f32 %v24, 0.1
    %v27 = vmul.f32 %v25, 0.1
    %v28 = vld [vmem:[#allocation2] sm:$0xff]
    %v29 = vld [vmem:[#allocation2 + $0x8] sm:$0xff]
    %30 = vmatprep.subr.mxu0 0.0
    %31 = vmatpush1.xpose.msra.mxu0 %v28
    %32 = vmatprep.subr.mxu0 0.0
    %33 = vmatpush1.xpose.msra.mxu0 %v29
    %34 = vmatprep.subr.mxu0 0.0
    %35 = vmatpush1.xpose.msra.mxu0 0.0
    %36 = vmatprep.subr.mxu0 0.0
    %37 = vmatpush1.xpose.msra.mxu0 0.0
    %38 = vmatprep.subr.mxu0 0.0
    %39 = vmatpush1.xpose.msra.mxu0 0.0
    %40 = vmatprep.subr.mxu0 0.0
    %41 = vmatpush1.xpose.msra.mxu0 0.0
    %42 = vmatprep.subr.mxu0 0.0
    %43 = vmatpush1.xpose.msra.mxu0 0.0
    %44 = vmatprep.subr.mxu0 0.0
    %45 = vmatpush1.xpose.msra.mxu0 0.0
    %46 = vmatprep.subr.mxu0 0.0
    %47 = vmatpush1.xpose.msra.mxu0 0.0
    %48 = vmatprep.subr.mxu0 0.0
    %49 = vmatpush1.xpose.msra.mxu0 0.0
    %50 = vmatprep.subr.mxu0 0.0
    %51 = vmatpush1.xpose.msra.mxu0 0.0
    %52 = vmatprep.subr.mxu0 0.0
    %53 = vmatpush1.xpose.msra.mxu0 0.0
    %54 = vmatprep.subr.mxu0 0.0
    %55 = vmatpush1.xpose.msra.mxu0 0.0
    %56 = vmatprep.subr.mxu0 0.0
    %57 = vmatpush1.xpose.msra.mxu0 0.0
    %58 = vmatprep.subr.mxu0 0.0
    %59 = vmatpush1.xpose.msra.mxu0 0.0
    %60 = vmatprep.subr.mxu0 0.0
    %61 = vmatpush1.xpose.msra.mxu0 0.0
    %62 = vmatprep.subr.mxu0 0.0
    %63 = vmatpush1.xpose.msra.mxu0 0.0
    %64 = vmatprep.subr.mxu0 0.0
    %65 = vmatpush1.xpose.msra.mxu0 0.0
    %66 = vmatprep.subr.mxu0 0.0
    %67 = vmatpush1.xpose.msra.mxu0 0.0
    %68 = vmatprep.subr.mxu0 0.0
    %69 = vmatpush1.xpose.msra.mxu0 0.0
    %70 = vmatprep.subr.mxu0 0.0
    %71 = vmatpush1.xpose.msra.mxu0 0.0
    %72 = vmatprep.subr.mxu0 0.0
    %73 = vmatpush1.xpose.msra.mxu0 0.0
    %74 = vmatprep.subr.mxu0 0.0
    %75 = vmatpush1.xpose.msra.mxu0 0.0
    %76 = vmatprep.subr.mxu0 0.0
    %77 = vmatpush1.xpose.msra.mxu0 0.0
    %78 = vmatprep.subr.mxu0 0.0
    %79 = vmatpush1.xpose.msra.mxu0 0.0
    %80 = vmatprep.subr.mxu0 0.0
    %81 = vmatpush1.xpose.msra.mxu0 0.0
    %82 = vmatprep.subr.mxu0 0.0
    %83 = vmatpush1.xpose.msra.mxu0 0.0
    %84 = vmatprep.subr.mxu0 0.0
    %85 = vmatpush1.xpose.msra.mxu0 0.0
    %86 = vmatprep.subr.mxu0 0.0
    %87 = vmatpush1.xpose.msra.mxu0 0.0
    %88 = vmatprep.subr.mxu0 0.0
    %89 = vmatpush1.xpose.msra.mxu0 0.0
    %90 = vmatprep.subr.mxu0 0.0
    %91 = vmatpush1.xpose.msra.mxu0 0.0
    %92 = vmatprep.subr.mxu0 0.0
    %93 = vmatpush1.xpose.msra.mxu0 0.0
    %94 = vmatprep.mubr.f32.mxu0 0.0
    %95 = vmatmul.mubr.f32.gmra.mrb[0].mxu0 %v26
    %v96 = vpop.f32.mrb[0].mxu0
    %v97 = vadd.f32 0.0, %v96
    %v98 = vpop.f32.mrb[0].mxu0
    %99 = vmatprep.mubr.f32.mxu0 0.0
    %100 = vmatmul.mubr.f32.gmra.mrb[0].mxu0 %v27
    %v101 = vpop.f32.mrb[0].mxu0
    %v102 = vadd.f32 0.0, %v101
    %v103 = vpop.f32.mrb[0].mxu0
    %104 = vdwg.mxu0
    %v105 = vmul.f32 %v97, 1.442695
    %v106 = vpow.pop %v105
    %v107 = vmul.f32 %v102, 1.442695
    %v108 = vpow.pop %v107
    %vm109 = vcmask 130048
    %v110 = vsel %vm109, %v106, 0.0
    %111 = vadd.xlane.f32.xlu0 %v110
    %v112 = vpop.xlane.xlu0 %111
    %v113 = vsel %vm109, %v108, 0.0
    %114 = vadd.xlane.f32.xlu0 %v113
    %v115 = vpop.xlane.xlu0 %114
    %v116 = vmul.f32 %v26, %v24
    %v117 = vmul.f32 %v27, %v25
    %118 = vadd.xlane.f32.xlu0 %v116
    %v119 = vpop.xlane.xlu0 %118
    %120 = vadd.xlane.f32.xlu0 %v117
    %v121 = vpop.xlane.xlu0 %120
    %v122 = vmul.f32 %v119, 1.442695
    %v123 = vpow.pop %v122
    %v124 = vmul.f32 %v121, 1.442695
    %v125 = vpow.pop %v124
    %v126 = vsub.f32 %v112, %v123
    %v127 = vsub.f32 %v115, %v125
    %v128 = vlog2.pop %v126
    %v129 = vmul.f32 %v128, 0.6931472
    %v130 = vlog2.pop %v127
    %v131 = vmul.f32 %v130, 0.6931472
    %vm132 = vcmask 7168
    %133 = vst.msk [vmem:[%s1] sm:$0xff] %vm132, %v129
    %134 = vst.msk [vmem:[%s1 + $0x8] sm:$0xff] %vm132, %v131
    // Predicated region
    $region10: #{tpu_custom_call.1} parent=1 // pred_check
      _
    $region11: #{tpu_custom_call.1} parent=1 // pred_check_branch
      %136 = sbr.rel (0) target = $region13
    $region12: #{tpu_custom_call.1} parent=1 // pred_region
      _
    $region13: #{tpu_custom_call.1} parent=1 // pred_fallthru
      _
    // Predicated region
    $region14: #{tpu_custom_call.1} parent=1 // pred_check
      _
    $region15: #{tpu_custom_call.1} parent=1 // pred_check_branch
      %138 = sbr.rel (0) target = $region17
    $region16: #{tpu_custom_call.1} parent=1 // pred_region
      _
    $region17: #{tpu_custom_call.1} parent=1 // pred_fallthru
      _
    %139 = vsyncpa [#allocation3], 1

// kernel: tpu_custom_call.1
$region0: #{tpu_custom_call.1}
  #allocation0 [shape = 'u32[]', space=smem, size = 0x4, offset = 0x4, fixed_abs, tag = 'smem constant byte address 0x4 - core index']
  #allocation1 [shape = 'u32[144,128]{1,0:T(1,128)}', space=vmem, size = 0x12000, scoped, tag = 'internal scratch']
  %s0 = inlined_call_operand.hbm [shape: f32[16,128], index: 0, kind: input, shape index: {}]
  %s1 = inlined_call_operand.vmem [shape: f32[16,1], index: 1, kind: output, shape index: {}]
  %s2 = sld [smem:[#allocation0]]
  $region18: #{tpu_custom_call.1} parent=0
    _
  %s4 = ssub.s32 1, %s2
  %s5 = scalar_select 0, %s4, %s2
  $region1: #{tpu_custom_call.1} parent=0
    #allocation2 [shape = 'u8[8192]{0}', space=vmem, size = 0x2000, scoped, tag = 'input window, operand 0, single buffered']
    #allocation3 [shape = 's32[1]{0}', space=sflag, size = 0x4, scoped, tag = 'scoped memory for tpu_custom_call.1']
    %6 = vsyncpa [#allocation3], 0
    // Predicated region
    $region2: #{tpu_custom_call.1} parent=1 // pred_check
      _
    $region3: #{tpu_custom_call.1} parent=1 // pred_check_branch
      %8 = sbr.rel (0) target = $region5
    $region4: #{tpu_custom_call.1} parent=1 // pred_region
      %s10 = ssub.s32 256, 256
      %11 = vsyncadd [#allocation3], %s10
      %s12 = sshll.u32 [#allocation2], 4
      %s13 = int_to_ptr.vmem [resolvable:$true] %s12
      %18 = dma.hbm_to_vmem [thread:$0]  %s0, 256, %s13, [#allocation3], 128, 128, 8
    $region5: #{tpu_custom_call.1} parent=1 // pred_fallthru
      _
    // Predicated region
    $region6: #{tpu_custom_call.1} parent=1 // pred_check
      _
    $region7: #{tpu_custom_call.1} parent=1 // pred_check_branch
      %20 = sbr.rel (0) target = $region9
    $region8: #{tpu_custom_call.1} parent=1 // pred_region
      %21 = dma.done [#allocation3], 256
    $region9: #{tpu_custom_call.1} parent=1 // pred_fallthru
      _
    %s22 = smul.u32 0, 16
    %s23 = scalar_lea.vmem [#allocation2], %s22
    %v24 = vld [vmem:[%s23] sm:$0xff]
    %v25 = vld [vmem:[%s23 + $0x8] sm:$0xff]
    %v26 = vmul.f32 %v24, 0.1
    %v27 = vmul.f32 %v25, 0.1
    %v28 = vld [vmem:[#allocation2] sm:$0xff]
    %v29 = vld [vmem:[#allocation2 + $0x8] sm:$0xff]
    %30 = vmatprep.subr.mxu0 0.0
    %31 = vmatpush1.xpose.msra.mxu0 %v28
    %32 = vmatprep.subr.mxu0 0.0
    %33 = vmatpush1.xpose.msra.mxu0 %v29
    %34 = vmatprep.subr.mxu0 0.0
    %35 = vmatpush1.xpose.msra.mxu0 0.0
    %36 = vmatprep.subr.mxu0 0.0
    %37 = vmatpush1.xpose.msra.mxu0 0.0
    %38 = vmatprep.subr.mxu0 0.0
    %39 = vmatpush1.xpose.msra.mxu0 0.0
    %40 = vmatprep.subr.mxu0 0.0
    %41 = vmatpush1.xpose.msra.mxu0 0.0
    %42 = vmatprep.subr.mxu0 0.0
    %43 = vmatpush1.xpose.msra.mxu0 0.0
    %44 = vmatprep.subr.mxu0 0.0
    %45 = vmatpush1.xpose.msra.mxu0 0.0
    %46 = vmatprep.subr.mxu0 0.0
    %47 = vmatpush1.xpose.msra.mxu0 0.0
    %48 = vmatprep.subr.mxu0 0.0
    %49 = vmatpush1.xpose.msra.mxu0 0.0
    %50 = vmatprep.subr.mxu0 0.0
    %51 = vmatpush1.xpose.msra.mxu0 0.0
    %52 = vmatprep.subr.mxu0 0.0
    %53 = vmatpush1.xpose.msra.mxu0 0.0
    %54 = vmatprep.subr.mxu0 0.0
    %55 = vmatpush1.xpose.msra.mxu0 0.0
    %56 = vmatprep.subr.mxu0 0.0
    %57 = vmatpush1.xpose.msra.mxu0 0.0
    %58 = vmatprep.subr.mxu0 0.0
    %59 = vmatpush1.xpose.msra.mxu0 0.0
    %60 = vmatprep.subr.mxu0 0.0
    %61 = vmatpush1.xpose.msra.mxu0 0.0
    %62 = vmatprep.subr.mxu0 0.0
    %63 = vmatpush1.xpose.msra.mxu0 0.0
    %64 = vmatprep.subr.mxu0 0.0
    %65 = vmatpush1.xpose.msra.mxu0 0.0
    %66 = vmatprep.subr.mxu0 0.0
    %67 = vmatpush1.xpose.msra.mxu0 0.0
    %68 = vmatprep.subr.mxu0 0.0
    %69 = vmatpush1.xpose.msra.mxu0 0.0
    %70 = vmatprep.subr.mxu0 0.0
    %71 = vmatpush1.xpose.msra.mxu0 0.0
    %72 = vmatprep.subr.mxu0 0.0
    %73 = vmatpush1.xpose.msra.mxu0 0.0
    %74 = vmatprep.subr.mxu0 0.0
    %75 = vmatpush1.xpose.msra.mxu0 0.0
    %76 = vmatprep.subr.mxu0 0.0
    %77 = vmatpush1.xpose.msra.mxu0 0.0
    %78 = vmatprep.subr.mxu0 0.0
    %79 = vmatpush1.xpose.msra.mxu0 0.0
    %80 = vmatprep.subr.mxu0 0.0
    %81 = vmatpush1.xpose.msra.mxu0 0.0
    %82 = vmatprep.subr.mxu0 0.0
    %83 = vmatpush1.xpose.msra.mxu0 0.0
    %84 = vmatprep.subr.mxu0 0.0
    %85 = vmatpush1.xpose.msra.mxu0 0.0
    %86 = vmatprep.subr.mxu0 0.0
    %87 = vmatpush1.xpose.msra.mxu0 0.0
    %88 = vmatprep.subr.mxu0 0.0
    %89 = vmatpush1.xpose.msra.mxu0 0.0
    %90 = vmatprep.subr.mxu0 0.0
    %91 = vmatpush1.xpose.msra.mxu0 0.0
    %92 = vmatprep.subr.mxu0 0.0
    %93 = vmatpush1.xpose.msra.mxu0 0.0
    %94 = vmatprep.mubr.f32.mxu0 0.0
    %95 = vmatmul.mubr.f32.gmra.mrb[0].mxu0 %v26
    %v96 = vpop.f32.mrb[0].mxu0
    %v97 = vadd.f32 0.0, %v96
    %v98 = vpop.f32.mrb[0].mxu0
    %99 = vmatprep.mubr.f32.mxu0 0.0
    %100 = vmatmul.mubr.f32.gmra.mrb[0].mxu0 %v27
    %v101 = vpop.f32.mrb[0].mxu0
    %v102 = vadd.f32 0.0, %v101
    %v103 = vpop.f32.mrb[0].mxu0
    %104 = vdwg.mxu0
    %v105 = vmul.f32 %v97, 1.442695
    %v106 = vpow.pop %v105
    %v107 = vmul.f32 %v102, 1.442695
    %v108 = vpow.pop %v107
    %vm109 = vcmask 130048
    %v110 = vsel %vm109, %v106, 0.0
    %111 = vadd.xlane.f32.xlu0 %v110
    %v112 = vpop.xlane.xlu0 %111
    %v113 = vsel %vm109, %v108, 0.0
    %114 = vadd.xlane.f32.xlu0 %v113
    %v115 = vpop.xlane.xlu0 %114
    %v116 = vmul.f32 %v26, %v24
    %v117 = vmul.f32 %v27, %v25
    %118 = vadd.xlane.f32.xlu0 %v116
    %v119 = vpop.xlane.xlu0 %118
    %120 = vadd.xlane.f32.xlu0 %v117
    %v121 = vpop.xlane.xlu0 %120
    %v122 = vmul.f32 %v119, 1.442695
    %v123 = vpow.pop %v122
    %v124 = vmul.f32 %v121, 1.442695
    %v125 = vpow.pop %v124
    %v126 = vsub.f32 %v112, %v123
    %v127 = vsub.f32 %v115, %v125
    %v128 = vlog2.pop %v126
    %v129 = vmul.f32 %v128, 0.6931472
    %v130 = vlog2.pop %v127
    %v131 = vmul.f32 %v130, 0.6931472
    %vm132 = vcmask 7168
    %133 = vst.msk [vmem:[%s1] sm:$0xff] %vm132, %v129
    %134 = vst.msk [vmem:[%s1 + $0x8] sm:$0xff] %vm132, %v131
    // Predicated region
    $region10: #{tpu_custom_call.1} parent=1 // pred_check
      _
    $region11: #{tpu_custom_call.1} parent=1 // pred_check_branch
      %136 = sbr.rel (0) target = $region13
    $region12: #{tpu_custom_call.1} parent=1 // pred_region
      _
    $region13: #{tpu_custom_call.1} parent=1 // pred_fallthru
      _
    // Predicated region
    $region14: #{tpu_custom_call.1} parent=1 // pred_check
      _
    $region15: #{tpu_custom_call.1} parent=1 // pred_check_branch
      %138 = sbr.rel (0) target = $region17
    $region16: #{tpu_custom_call.1} parent=1 // pred_region
      _
    $region17: #{tpu_custom_call.1} parent=1 // pred_fallthru
      _
    %139 = vsyncpa [#allocation3], 1

</llo_original>
